<compile_context>
chip_gen: v5e
topology: v5e:2x2
jax: 0.10.0
libtpu: 0.0.40
codegen_flags: <defaults>
</compile_context>

<pallas_src>
from functools import partial

import numpy as np
import jax
import jax.numpy as jnp
from jax import lax
from jax.experimental import pallas as pl
from jax.experimental.pallas import tpu as pltpu


# --------------------------------------------------------------------------------------
# Small helpers
# --------------------------------------------------------------------------------------
def _round_up(x, m):
    return -(-x // m) * m


def _vmem_capacity_bytes():
    """Generation-aware VMEM capacity (v5e/v6e: 128 MiB, v7x: 64 MiB per TC)."""
    try:
        return int(pltpu.get_tpu_info().vmem_capacity_bytes)
    except Exception:
        return 64 << 20      # conservative default (v7x per-core VMEM)


def _reflect_index(i, L):
    """PyTorch ReflectionPad2d index map (no edge repeat)."""
    if i < 0:
        return -i
    if i >= L:
        return 2 * L - 2 - i
    return i


def _build_row_tiles(HT, TH, S, Hp, H, Hu, u, p):
    """One-hot row-map slabs: Rt[h, s, i] = 1 iff padded-upsampled row (h*TH + s) reads
    original row i.  Rows past the padded image (ragged last tile) are clamped; they only
    produce junk output rows that the wrapper crops."""
    rt = np.zeros((HT, S, H), np.float32)
    for h in range(HT):
        for s in range(S):
            r = min(h * TH + s, Hp - 1)
            src = _reflect_index(r - p, Hu) // u
            rt[h, s, src] = 1.0
    return rt


def _build_tap_matrices(weight, KH, KW, Cin, Cout, W, Wo, Wu, u, p):
    """Fold horizontal upsample + reflection pad + kw taps + conv weights into KH matrices:
       M[kh, ci*W + j, co*Wo + wo] = sum_kw w[co, ci, kh, kw] * [cmap(wo + kw) == j]."""
    E = np.zeros((KW, W, Wo), np.float32)
    for kw in range(KW):
        for wo in range(Wo):
            src = _reflect_index(wo + kw - p, Wu) // u
            E[kw, src, wo] = 1.0
    M = jnp.einsum("oiab,bjv->aijov", weight, jnp.asarray(E))
    return M.reshape(KH, Cin * W, Cout * Wo)


def _reference_forward(x, weight, bias, *, stride, upsample, pad):
    """Unfused XLA path (also used as fallback for stride != 1 / oversized configs)."""
    u = int(upsample) if upsample else 1
    if u > 1:
        x = jnp.repeat(jnp.repeat(x, u, axis=2), u, axis=3)
    if pad:
        x = jnp.pad(x, ((0, 0), (0, 0), (pad, pad), (pad, pad)), mode="reflect")
    out = lax.conv_general_dilated(
        x, weight, (stride, stride), "VALID",
        dimension_numbers=("NCHW", "OIHW", "NCHW"))
    return out + bias[None, :, None, None]


def _choose_tile_rows(Ho, KH, H, CW, CWo, budget_bytes):
    """Largest TH (multiple of 8) whose per-tile working set fits the budget."""
    if Ho < 8:
        return Ho                      # single full tile; block dim == full array dim
    best = 8
    for th in range(8, _round_up(Ho, 8) + 1, 8):
        s = th + KH - 1
        per_tile = 4 * (2 * s * H            # Rt slab (double buffered)
                        + s * CW              # vertically gathered rows
                        + (KH + 1) * th * CW  # row-shifted slice temps (upper bound)
                        + th * CWo            # accumulator
                        + 2 * th * CWo)       # output block (double buffered)
        if per_tile <= budget_bytes:
            best = th
    return best


# --------------------------------------------------------------------------------------
# Kernel
# --------------------------------------------------------------------------------------
def _upconv_kernel(xh_ref, rt_ref, m_ref, b_ref, o_ref, *, TH, KH):
    """One (image, row-tile) grid step.

    xh_ref : (1, H, Cin*W)        original image, rows x (ci, j) lanes   (resident per n)
    rt_ref : (1, S, H)            one-hot vertical (upsample+reflect) row map for this tile
    m_ref  : (KH, Cin*W, Cout*Wo) folded horizontal-gather x weight matrices (resident)
    b_ref  : (1, Cout*Wo)         bias broadcast row (resident)
    o_ref  : (1, TH, Cout*Wo)     lane-dense output block
    """
    # Vertical nearest-upsample + reflection pad: one MXU matmul (no gathers, no DMA math).
    xr = jnp.dot(rt_ref[0], xh_ref[0], preferred_element_type=jnp.float32)   # (S, Cin*W)

    # Horizontal upsample/pad + kw taps + weights are folded into m_ref[kh]; accumulate the
    # KH row-shifted matmuls.  No concatenate, no junk columns.
    acc = jnp.dot(xr[0:TH], m_ref[0], preferred_element_type=jnp.float32)    # (TH, Cout*Wo)
    for kh in range(1, KH):
        acc = acc + jnp.dot(xr[kh:kh + TH], m_ref[kh],
                            preferred_element_type=jnp.float32)

    o_ref[0] = (acc + b_ref[...]).astype(o_ref.dtype)


# --------------------------------------------------------------------------------------
# Wrapper
# --------------------------------------------------------------------------------------
def upsample_conv_layer(x_nchw, weight_oihw, bias, *, kernel_size, stride,
                        upsample=None, tile_rows=None):
    """Forward pass of UpsampleConvLayer.  x_nchw: (N, Cin, H, W) -> (N, Cout, Ho, Wo)."""
    x = x_nchw.astype(jnp.float32)
    weight = weight_oihw.astype(jnp.float32)
    bias = bias.astype(jnp.float32)

    N, Cin, H, W = x.shape
    KH = KW = int(kernel_size)
    Cout = weight.shape[0]
    u = int(upsample) if upsample else 1
    p = int(np.floor(kernel_size / 2))

    Hu, Wu = H * u, W * u
    Hp, Wp = Hu + 2 * p, Wu + 2 * p
    Ho, Wo = Hp - KH + 1, Wp - KW + 1

    CW, CWo = Cin * W, Cout * Wo
    cap = _vmem_capacity_bytes()

    # Resident operands: folded tap matrices + per-image input + bias (double-buffered input).
    resident_bytes = 4 * (KH * CW * CWo + 2 * H * CW + CWo)
    if stride != 1 or resident_bytes > int(0.35 * cap):
        # TODO(synk): strided conv and very large Cin*W x Cout*Wo configs need a different
        # (two-stage gather) kernel; fall back to the unfused XLA path for those.
        return _reference_forward(x, weight, bias, stride=stride, upsample=u, pad=p)

    # ---- row-tile selection (generation-aware VMEM budget, ragged last tile allowed) ----
    budget = max(int(0.4 * cap) - resident_bytes, 4 << 20)
    if tile_rows is None:
        TH = _choose_tile_rows(Ho, KH, H, CW, CWo, budget)
    else:
        TH = int(tile_rows)
        TH = Ho if TH >= Ho else max(8, (TH // 8) * 8)
    if TH >= Ho:
        TH, HT, Ho_pad = Ho, 1, Ho
    else:
        HT = -(-Ho // TH)
        Ho_pad = HT * TH
    S = TH + KH - 1

    # ---- host-side layout / constant folding (all on the SMALL pre-upsample input) ------
    xh = jnp.transpose(x, (0, 2, 1, 3)).reshape(N, H, CW)          # (N, H, Cin*W)
    rt = jnp.asarray(_build_row_tiles(HT, TH, S, Hp, H, Hu, u, p))  # (HT, S, H)
    mtap = _build_tap_matrices(weight, KH, KW, Cin, Cout, W, Wo, Wu, u, p)
    brow = jnp.repeat(bias, Wo).reshape(1, CWo)                    # (1, Cout*Wo)

    kernel = partial(_upconv_kernel, TH=TH, KH=KH)

    vmem_est = 4 * (2 * H * CW + 2 * S * H + KH * CW * CWo + CWo
                    + S * CW + (KH + 1) * TH * CW + TH * CWo + 2 * TH * CWo)
    vmem_limit = int(min(0.6 * cap, max(2 * vmem_est + (8 << 20), 24 << 20)))

    cost = pl.CostEstimate(
        flops=2 * N * HT * (S * H * CW + KH * TH * CW * CWo),
        transcendentals=0,
        bytes_accessed=4 * (xh.size + rt.size + mtap.size + brow.size + N * Ho_pad * CWo),
    )

    out_flat = pl.pallas_call(
        kernel,
        out_shape=jax.ShapeDtypeStruct((N, Ho_pad, CWo), jnp.float32),
        grid_spec=pltpu.PrefetchScalarGridSpec(
            num_scalar_prefetch=0,
            grid=(N, HT),
            in_specs=[
                pl.BlockSpec((1, H, CW), lambda n, h: (n, 0, 0)),        # image (resident per n)
                pl.BlockSpec((1, S, H), lambda n, h: (h, 0, 0)),         # row-map slab per tile
                pl.BlockSpec((KH, CW, CWo), lambda n, h: (0, 0, 0)),     # folded taps (resident)
                pl.BlockSpec((1, CWo), lambda n, h: (0, 0)),             # bias row (resident)
            ],
            out_specs=pl.BlockSpec((1, TH, CWo), lambda n, h: (n, h, 0)),
        ),
        compiler_params=pltpu.CompilerParams(
            dimension_semantics=("parallel", "parallel"),   # batch + row tiles (v7x 2 TCs)
            vmem_limit_bytes=vmem_limit,
        ),
        cost_estimate=cost,
    )(xh, rt, mtap, brow)

    # (N, Ho_pad, Cout*Wo) -> NCHW.  Single layout pass; a fused consumer could instead take
    # the (N, Ho, Cout*Wo) output directly and skip it.
    out = out_flat.reshape(N, Ho_pad, Cout, Wo)[:, :Ho]
    return jnp.transpose(out, (0, 2, 1, 3))


# --------------------------------------------------------------------------------------
# Test
# --------------------------------------------------------------------------------------
if __name__ == "__main__":
    in_channels, out_channels, kernel_size, stride, upsample = 4, 8, 3, 1, 2

    key = jax.random.PRNGKey(0)
    kx, kw, kb = jax.random.split(key, 3)
    x = jax.random.normal(kx, (2, in_channels, 16, 16), dtype=jnp.float32)
    weight = 0.1 * jax.random.normal(
        kw, (out_channels, in_channels, kernel_size, kernel_size), dtype=jnp.float32)
    bias = 0.1 * jax.random.normal(kb, (out_channels,), dtype=jnp.float32)

    # Reference (unfused): nearest upsample + reflection pad + VALID conv + bias.
    ref = _reference_forward(x, weight, bias, stride=stride, upsample=upsample,
                             pad=kernel_size // 2)

    # Multi-tile path: 4 row tiles per image (exercises cross-tile pipelining + ragged logic).
    out = upsample_conv_layer(x, weight, bias, kernel_size=kernel_size, stride=stride,
                              upsample=upsample, tile_rows=8)
    out = jax.block_until_ready(out)
    assert out.shape == (2, out_channels, 32, 32), out.shape
    np.testing.assert_allclose(np.asarray(out), np.asarray(ref), rtol=1e-4, atol=1e-4)

    # Auto tile size (single row tile per image; cross-image prefetch keeps DMA overlapped).
    out2 = upsample_conv_layer(x, weight, bias, kernel_size=kernel_size, stride=stride,
                               upsample=upsample)
    out2 = jax.block_until_ready(out2)
    np.testing.assert_allclose(np.asarray(out2), np.asarray(ref), rtol=1e-4, atol=1e-4)

    print("KERNEL_OK")
</pallas_src>

<mosaic_0001>
module attributes {stable_mosaic.version = 11 : i64} {
  func.func @_upconv_kernel(%arg0: i32, %arg1: i32, %arg2: memref<1x16x64xf32, #tpu.memory_space<vmem>>, %arg3: memref<1x10x16xf32, #tpu.memory_space<vmem>>, %arg4: memref<3x64x256xf32, #tpu.memory_space<vmem>>, %arg5: memref<1x256xf32, #tpu.memory_space<vmem>>, %arg6: memref<1x8x256xf32, #tpu.memory_space<vmem>>) attributes {dimension_semantics = [#tpu.dimension_semantics<parallel>, #tpu.dimension_semantics<parallel>], iteration_bounds = array<i64: 2, 4>, scalar_prefetch = 0 : i64, scratch_operands = 0 : i64, tpu.core_type = #tpu.core_type<tc>, window_params = [{transform_indices = @transform_0, window_bounds = array<i64: 1, 16, 64>}, {transform_indices = @transform_1, window_bounds = array<i64: 1, 10, 16>}, {pipeline_mode = #tpu.pipeline_mode<synchronous>, transform_indices = @transform_2, window_bounds = array<i64: 3, 64, 256>}, {pipeline_mode = #tpu.pipeline_mode<synchronous>, transform_indices = @transform_3, window_bounds = array<i64: 1, 256>}, {transform_indices = @transform_4, window_bounds = array<i64: 1, 8, 256>}]} {
    %c0 = arith.constant 0 : index
    %c0_0 = arith.constant 0 : index
    %c0_1 = arith.constant 0 : index
    %0 = vector.load %arg3[%c0, %c0_0, %c0_1] : memref<1x10x16xf32, #tpu.memory_space<vmem>>, vector<1x10x16xf32>
    %1 = vector.shape_cast %0 : vector<1x10x16xf32> to vector<10x16xf32>
    %c0_2 = arith.constant 0 : index
    %c0_3 = arith.constant 0 : index
    %c0_4 = arith.constant 0 : index
    %2 = vector.load %arg2[%c0_2, %c0_3, %c0_4] : memref<1x16x64xf32, #tpu.memory_space<vmem>>, vector<1x16x64xf32>
    %3 = vector.shape_cast %2 : vector<1x16x64xf32> to vector<16x64xf32>
    %cst = arith.constant dense<0.000000e+00> : vector<10x64xf32>
    %4 = tpu.matmul %1, %3, %cst {dimension_numbers = #tpu.dot_dimension_numbers<[1], [0], [0], [1], [0, 0, 1, 1], [], []>} : vector<10x16xf32>, vector<16x64xf32>, vector<10x64xf32> -> vector<10x64xf32>
    %5 = vector.extract_strided_slice %4 {offsets = [0, 0], sizes = [8, 64], strides = [1, 1]} : vector<10x64xf32> to vector<8x64xf32>
    %c0_5 = arith.constant 0 : index
    %c0_6 = arith.constant 0 : index
    %c0_7 = arith.constant 0 : index
    %6 = vector.load %arg4[%c0_5, %c0_6, %c0_7] : memref<3x64x256xf32, #tpu.memory_space<vmem>>, vector<1x64x256xf32>
    %7 = vector.shape_cast %6 : vector<1x64x256xf32> to vector<64x256xf32>
    %cst_8 = arith.constant dense<0.000000e+00> : vector<8x256xf32>
    %8 = tpu.matmul %5, %7, %cst_8 {dimension_numbers = #tpu.dot_dimension_numbers<[1], [0], [0], [1], [0, 0, 1, 1], [], []>} : vector<8x64xf32>, vector<64x256xf32>, vector<8x256xf32> -> vector<8x256xf32>
    %9 = vector.extract_strided_slice %4 {offsets = [1, 0], sizes = [8, 64], strides = [1, 1]} : vector<10x64xf32> to vector<8x64xf32>
    %c1 = arith.constant 1 : index
    %c0_9 = arith.constant 0 : index
    %c0_10 = arith.constant 0 : index
    %10 = vector.load %arg4[%c1, %c0_9, %c0_10] : memref<3x64x256xf32, #tpu.memory_space<vmem>>, vector<1x64x256xf32>
    %11 = vector.shape_cast %10 : vector<1x64x256xf32> to vector<64x256xf32>
    %cst_11 = arith.constant dense<0.000000e+00> : vector<8x256xf32>
    %12 = tpu.matmul %9, %11, %cst_11 {dimension_numbers = #tpu.dot_dimension_numbers<[1], [0], [0], [1], [0, 0, 1, 1], [], []>} : vector<8x64xf32>, vector<64x256xf32>, vector<8x256xf32> -> vector<8x256xf32>
    %13 = arith.addf %8, %12 : vector<8x256xf32>
    %14 = vector.extract_strided_slice %4 {offsets = [2, 0], sizes = [8, 64], strides = [1, 1]} : vector<10x64xf32> to vector<8x64xf32>
    %c2 = arith.constant 2 : index
    %c0_12 = arith.constant 0 : index
    %c0_13 = arith.constant 0 : index
    %15 = vector.load %arg4[%c2, %c0_12, %c0_13] : memref<3x64x256xf32, #tpu.memory_space<vmem>>, vector<1x64x256xf32>
    %16 = vector.shape_cast %15 : vector<1x64x256xf32> to vector<64x256xf32>
    %cst_14 = arith.constant dense<0.000000e+00> : vector<8x256xf32>
    %17 = tpu.matmul %14, %16, %cst_14 {dimension_numbers = #tpu.dot_dimension_numbers<[1], [0], [0], [1], [0, 0, 1, 1], [], []>} : vector<8x64xf32>, vector<64x256xf32>, vector<8x256xf32> -> vector<8x256xf32>
    %18 = arith.addf %13, %17 : vector<8x256xf32>
    %c0_15 = arith.constant 0 : index
    %c0_16 = arith.constant 0 : index
    %19 = vector.load %arg5[%c0_15, %c0_16] : memref<1x256xf32, #tpu.memory_space<vmem>>, vector<1x256xf32>
    %20 = vector.broadcast %19 : vector<1x256xf32> to vector<8x256xf32>
    %21 = arith.addf %18, %20 : vector<8x256xf32>
    %c0_17 = arith.constant 0 : index
    %c0_18 = arith.constant 0 : index
    %c0_19 = arith.constant 0 : index
    %22 = vector.load %arg6[%c0_17, %c0_18, %c0_19] : memref<1x8x256xf32, #tpu.memory_space<vmem>>, vector<1x8x256xf32>
    %23 = vector.shape_cast %22 : vector<1x8x256xf32> to vector<8x256xf32>
    %24 = vector.shape_cast %21 : vector<8x256xf32> to vector<1x8x256xf32>
    tpu.vector_store %arg6[%c0_17, %c0_18, %c0_19], %24 {strides = array<i32>} : memref<1x8x256xf32, #tpu.memory_space<vmem>>, vector<1x8x256xf32>,
    return
  }
  func.func @transform_0(%arg0: i32, %arg1: i32) -> (i32, i32, i32) {
    %c0_i32 = arith.constant 0 : i32
    %c0_i32_0 = arith.constant 0 : i32
    %c0_i32_1 = arith.constant 0 : i32
    return %arg0, %c0_i32, %c0_i32_0 : i32, i32, i32
  }
  func.func @transform_1(%arg0: i32, %arg1: i32) -> (i32, i32, i32) {
    %c0_i32 = arith.constant 0 : i32
    %c0_i32_0 = arith.constant 0 : i32
    %c0_i32_1 = arith.constant 0 : i32
    return %arg1, %c0_i32, %c0_i32_0 : i32, i32, i32
  }
  func.func @transform_2(%arg0: i32, %arg1: i32) -> (i32, i32, i32) {
    %c0_i32 = arith.constant 0 : i32
    %c0_i32_0 = arith.constant 0 : i32
    %c0_i32_1 = arith.constant 0 : i32
    %c0_i32_2 = arith.constant 0 : i32
    return %c0_i32, %c0_i32_0, %c0_i32_1 : i32, i32, i32
  }
  func.func @transform_3(%arg0: i32, %arg1: i32) -> (i32, i32) {
    %c0_i32 = arith.constant 0 : i32
    %c0_i32_0 = arith.constant 0 : i32
    %c0_i32_1 = arith.constant 0 : i32
    return %c0_i32, %c0_i32_0 : i32, i32
  }
  func.func @transform_4(%arg0: i32, %arg1: i32) -> (i32, i32, i32) {
    %c0_i32 = arith.constant 0 : i32
    %c0_i32_0 = arith.constant 0 : i32
    return %arg0, %arg1, %c0_i32 : i32, i32, i32
  }
}

</mosaic_0001>

<llo_original>
// kernel: tpu_custom_call.1
$region0: #{tpu_custom_call.1}
  #allocation0 [shape = 'u32[]', space=smem, size = 0x4, offset = 0x4, fixed_abs, tag = 'smem constant byte address 0x4 - core index']
  #allocation1 [shape = 'u32[72,128]{1,0:T(1,128)}', space=vmem, size = 0x9000, scoped, tag = 'internal scratch']
  %s0 = inlined_call_operand.vmem [shape: f32[2,16,64], index: 0, kind: input, shape index: {}]
  %s1 = inlined_call_operand.vmem [shape: f32[4,10,16], index: 1, kind: input, shape index: {}]
  %s2 = inlined_call_operand.hbm [shape: f32[3,64,256], index: 2, kind: input, shape index: {}]
  %s3 = inlined_call_operand.vmem [shape: f32[1,256], index: 3, kind: input, shape index: {}]
  %s4 = inlined_call_operand.hbm [shape: f32[2,32,256], index: 4, kind: output, shape index: {}]
  %s5 = sld [smem:[#allocation0]]
  $region53: #{tpu_custom_call.1} parent=0
    _
  %s7 = ssub.s32 1, %s5
  %s8 = scalar_select 0, %s7, %s5
  $region1: #{tpu_custom_call.1} parent=0
    #allocation2 [shape = 'u8[196608]{0}', space=vmem, size = 0x30000, scoped, tag = 'input window, operand 2, single buffered']
    #allocation3 [shape = 's32[2]{0}', space=sflag, size = 0x8, scoped, tag = 'scoped memory for tpu_custom_call.1']
    #allocation4 [shape = 's32[2]{0}', space=sflag, size = 0x8, scoped, tag = 'scoped memory for tpu_custom_call.1']
    #allocation5 [shape = 'u8[16384]{0}', space=vmem, size = 0x4000, scoped, tag = 'output window, operand 0']
    %9 = vsyncpa [#allocation3], 0
    %10 = vsyncpa [#allocation4], 0
    %s11 = scalar_lea.sflag [#allocation4], 1
    %12 = vsyncpa %s11, 0
    loop: start=0, step=1, limit=10
    $region2: #{tpu_custom_call.1} parent=1 // loop_pre_header
      _
    $region3: #{tpu_custom_call.1} parent=1 // loop_header
      %s14 = sphi 0, %s18
      %p15 = scmp.ge.s32.totalorder %s14, 10
      %s21 = sphi 0, %s33
      %s22 = sphi 0, %s29
      %s23 = sphi 0, %s21
      %s24 = sphi 0, %s22
      %s25 = sphi 0, %s23
      %s26 = sphi 0, %s24
      %s36 = sphi 0, %s38
      %s39 = sphi 0, %s36
      %s40 = sphi 0, %s39
      %s56 = sphi 0, %s40
      %s62 = sphi 0, %s64
      %s65 = sphi 0, %s62
      %s66 = sphi 0, %s65
      %s82 = sphi 0, %s66
      %s86 = sphi 0, %s86
      %s88 = sphi 0, %s86
      %s89 = sphi 0, %s88
      %s103 = sphi 0, %s89
      %s107 = sphi 0, %s107
      %s109 = sphi 0, %s107
      %s110 = sphi 0, %s109
      %s124 = sphi 0, %s110
      %s132 = sphi 0, %s134
      %s135 = sphi 0, %s132
      %s136 = sphi 0, %s135
      %s152 = sphi 0, %s136
    $region4: #{tpu_custom_call.1} parent=1 // loop_header_branch
      %17 = sbr.rel (%p15) target = $region8
    $region5: #{tpu_custom_call.1} parent=1 // loop_body
      %s19 = ssub.s32 %s14, 1
      %s20 = ssub.s32 %s14, 2
      %s27 = sadd.s32 1, %s22
      %p28 = scmp.ge.s32.totalorder %s27, 4
      %s29 = scalar_select %p28, 0, %s27
      %s30 = sadd.s32 1, %s21
      %s31 = scalar_select %p28, %s30, %s21
      %p32 = scmp.ge.s32.totalorder %s31, 2
      %s33 = scalar_select %p32, 0, %s31
      %s34 = ssub.s32 %s21, %s33
      %p35 = scmp.eq.s32.totalorder %s34, 0
      %s37 = sadd.s32 %s36, 1
      %s38 = scalar_select %p35, %s36, %s37
      %p41 = pneg %p35
      %p42 = scmp.eq.s32.totalorder %s14, 7
      %p43 = por %p41, %p42
      %p44 = scmp.ne.s32.totalorder %s36, %s39
      %p45 = scmp.eq.s32.totalorder %s14, 0
      %p46 = por %p44, %p45
      %p47 = scmp.ne.s32.totalorder %s36, %s39
      %p48 = scmp.eq.s32.totalorder %s19, 7
      %p49 = por %p47, %p48
      %p50 = scmp.ne.s32.totalorder %s39, %s40
      %p51 = scmp.eq.s32.totalorder %s19, 0
      %p52 = por %p50, %p51
      %p53 = scmp.ne.s32.totalorder %s39, %s40
      %p54 = scmp.eq.s32.totalorder %s20, 7
      %p55 = por %p53, %p54
      %p57 = scmp.ne.s32.totalorder %s40, %s56
      %p58 = scmp.eq.s32.totalorder %s20, 0
      %p59 = por %p57, %p58
      %s60 = ssub.s32 %s22, %s29
      %p61 = scmp.eq.s32.totalorder %s60, 0
      %s63 = sadd.s32 %s62, 1
      %s64 = scalar_select %p61, %s62, %s63
      %p67 = pneg %p61
      %p68 = scmp.eq.s32.totalorder %s14, 7
      %p69 = por %p67, %p68
      %p70 = scmp.ne.s32.totalorder %s62, %s65
      %p71 = scmp.eq.s32.totalorder %s14, 0
      %p72 = por %p70, %p71
      %p73 = scmp.ne.s32.totalorder %s62, %s65
      %p74 = scmp.eq.s32.totalorder %s19, 7
      %p75 = por %p73, %p74
      %p76 = scmp.ne.s32.totalorder %s65, %s66
      %p77 = scmp.eq.s32.totalorder %s19, 0
      %p78 = por %p76, %p77
      %p79 = scmp.ne.s32.totalorder %s65, %s66
      %p80 = scmp.eq.s32.totalorder %s20, 7
      %p81 = por %p79, %p80
      %p83 = scmp.ne.s32.totalorder %s66, %s82
      %p84 = scmp.eq.s32.totalorder %s20, 0
      %p85 = por %p83, %p84
      %s87 = sadd.s32 %s86, 1
      %p90 = scmp.eq.s32.totalorder %s14, 7
      %p91 = scmp.ne.s32.totalorder %s86, %s88
      %p92 = scmp.eq.s32.totalorder %s14, 0
      %p93 = por %p91, %p92
      %p94 = scmp.ne.s32.totalorder %s86, %s88
      %p95 = scmp.eq.s32.totalorder %s19, 7
      %p96 = por %p94, %p95
      %p97 = scmp.ne.s32.totalorder %s88, %s89
      %p98 = scmp.eq.s32.totalorder %s19, 0
      %p99 = por %p97, %p98
      %p100 = scmp.ne.s32.totalorder %s88, %s89
      %p101 = scmp.eq.s32.totalorder %s20, 7
      %p102 = por %p100, %p101
      %p104 = scmp.ne.s32.totalorder %s89, %s103
      %p105 = scmp.eq.s32.totalorder %s20, 0
      %p106 = por %p104, %p105
      %s108 = sadd.s32 %s107, 1
      %p111 = scmp.eq.s32.totalorder %s14, 7
      %p112 = scmp.ne.s32.totalorder %s107, %s109
      %p113 = scmp.eq.s32.totalorder %s14, 0
      %p114 = por %p112, %p113
      %p115 = scmp.ne.s32.totalorder %s107, %s109
      %p116 = scmp.eq.s32.totalorder %s19, 7
      %p117 = por %p115, %p116
      %p118 = scmp.ne.s32.totalorder %s109, %s110
      %p119 = scmp.eq.s32.totalorder %s19, 0
      %p120 = por %p118, %p119
      %p121 = scmp.ne.s32.totalorder %s109, %s110
      %p122 = scmp.eq.s32.totalorder %s20, 7
      %p123 = por %p121, %p122
      %p125 = scmp.ne.s32.totalorder %s110, %s124
      %p126 = scmp.eq.s32.totalorder %s20, 0
      %p127 = por %p125, %p126
      %s128 = ssub.s32 %s21, %s33
      %s129 = ssub.s32 %s22, %s29
      %s130 = sor.u32 %s128, %s129
      %p131 = scmp.eq.s32.totalorder %s130, 0
      %s133 = sadd.s32 %s132, 1
      %s134 = scalar_select %p131, %s132, %s133
      %p137 = pneg %p131
      %p138 = scmp.eq.s32.totalorder %s14, 7
      %p139 = por %p137, %p138
      %p140 = scmp.ne.s32.totalorder %s132, %s135
      %p141 = scmp.eq.s32.totalorder %s14, 0
      %p142 = por %p140, %p141
      %p143 = scmp.ne.s32.totalorder %s132, %s135
      %p144 = scmp.eq.s32.totalorder %s19, 7
      %p145 = por %p143, %p144
      %p146 = scmp.ne.s32.totalorder %s135, %s136
      %p147 = scmp.eq.s32.totalorder %s19, 0
      %p148 = por %p146, %p147
      %p149 = scmp.ne.s32.totalorder %s135, %s136
      %p150 = scmp.eq.s32.totalorder %s20, 7
      %p151 = por %p149, %p150
      %p153 = scmp.ne.s32.totalorder %s136, %s152
      %p154 = scmp.eq.s32.totalorder %s20, 0
      %p155 = por %p153, %p154
      %p156 = scmp.le.s32.totalorder 1, %s14
      %p157 = scmp.lt.s32.totalorder %s14, 9
      %p158 = pnand %p156, %p157
      %p159 = pneg %p158
      // Predicated region
      $region9: #{tpu_custom_call.1} parent=5 // pred_check
        _
      $region10: #{tpu_custom_call.1} parent=5 // pred_check_branch
        %161 = sbr.rel (%p158) target = $region12
      $region11: #{tpu_custom_call.1} parent=5 // pred_region
        %s162 = ssub.s32 %s14, 1
        // Predicated region
        $region13: #{tpu_custom_call.1} parent=11 // pred_check
          %p163 = pneg %p99
        $region14: #{tpu_custom_call.1} parent=11 // pred_check_branch
          %165 = sbr.rel (%p163) target = $region16
        $region15: #{tpu_custom_call.1} parent=11 // pred_region
          %167 = vsyncadd [#allocation3], 0
          %s168 = sshll.u32 %s2, 4
          %s169 = int_to_ptr.hbm [resolvable:$true] %s168
          %s170 = sshll.u32 [#allocation2], 4
          %s171 = int_to_ptr.vmem [resolvable:$true] %s170
          %176 = dma.hbm_to_vmem [thread:$0]  %s169, 6144, %s171, [#allocation3], 256, 256, 16
        $region16: #{tpu_custom_call.1} parent=11 // pred_fallthru
          _
        // Predicated region
        $region17: #{tpu_custom_call.1} parent=11 // pred_check
          %p177 = pneg %p120
        $region18: #{tpu_custom_call.1} parent=11 // pred_check_branch
          %179 = sbr.rel (%p177) target = $region20
        $region19: #{tpu_custom_call.1} parent=11 // pred_region
          _
        $region20: #{tpu_custom_call.1} parent=11 // pred_fallthru
          _
      $region12: #{tpu_custom_call.1} parent=5 // pred_fallthru
        _
      %p180 = scmp.lt.s32.totalorder %s14, 8
      // Predicated region
      $region21: #{tpu_custom_call.1} parent=5 // pred_check
        %p181 = pneg %p180
      $region22: #{tpu_custom_call.1} parent=5 // pred_check_branch
        %183 = sbr.rel (%p181) target = $region24
      $region23: #{tpu_custom_call.1} parent=5 // pred_region
        // Predicated region
        $region25: #{tpu_custom_call.1} parent=23 // pred_check
          %p184 = pneg %p46
        $region26: #{tpu_custom_call.1} parent=23 // pred_check_branch
          %186 = sbr.rel (%p184) target = $region28
        $region27: #{tpu_custom_call.1} parent=23 // pred_region
          %p187 = scmp.lt.s32.totalorder %s21, 1
          %s188 = scalar_select %p187, %s21, 1
          %s189 = smul.addr %s188, 2
          %s190 = smul.addr %s189, 8
          %s191 = scalar_lea.vmem %s0, %s190
        $region28: #{tpu_custom_call.1} parent=23 // pred_fallthru
          _
        // Predicated region
        $region29: #{tpu_custom_call.1} parent=23 // pred_check
          %p192 = pneg %p72
        $region30: #{tpu_custom_call.1} parent=23 // pred_check_branch
          %194 = sbr.rel (%p192) target = $region32
        $region31: #{tpu_custom_call.1} parent=23 // pred_region
          %p195 = scmp.lt.s32.totalorder %s22, 3
          %s196 = scalar_select %p195, %s22, 3
          %s197 = smul.addr %s196, 2
          %s198 = smul.addr %s197, 8
          %s199 = scalar_lea.vmem %s1, %s198
        $region32: #{tpu_custom_call.1} parent=23 // pred_fallthru
          _
      $region24: #{tpu_custom_call.1} parent=5 // pred_fallthru
        _
      %p200 = scmp.le.s32.totalorder 1, %s14
      %p201 = scmp.lt.s32.totalorder %s14, 9
      %p202 = pnand %p200, %p201
      %p203 = pneg %p202
      // Predicated region
      $region33: #{tpu_custom_call.1} parent=5 // pred_check
        _
      $region34: #{tpu_custom_call.1} parent=5 // pred_check_branch
        %205 = sbr.rel (%p202) target = $region36
      $region35: #{tpu_custom_call.1} parent=5 // pred_region
        %s206 = ssub.s32 %s14, 1
        // Predicated region
        $region37: #{tpu_custom_call.1} parent=35 // pred_check
          %p207 = pneg %p99
        $region38: #{tpu_custom_call.1} parent=35 // pred_check_branch
          %209 = sbr.rel (%p207) target = $region40
        $region39: #{tpu_custom_call.1} parent=35 // pred_region
          %211 = dma.done [#allocation3], 6144
        $region40: #{tpu_custom_call.1} parent=35 // pred_fallthru
          _
        %p212 = scmp.lt.s32.totalorder %s23, 1
        %s213 = scalar_select %p212, %s23, 1
        %s214 = smul.addr %s213, 2
        %s215 = smul.addr %s214, 8
        %s216 = scalar_lea.vmem %s0, %s215
        %p217 = pneg %p52
        %p218 = pneg %p49
        %p219 = scmp.lt.s32.totalorder %s24, 3
        %s220 = scalar_select %p219, %s24, 3
        %s221 = smul.addr %s220, 2
        %s222 = smul.addr %s221, 8
        %s223 = scalar_lea.vmem %s1, %s222
        %p224 = pneg %p78
        %p225 = pneg %p75
        %p226 = pneg %p99
        %p227 = pneg %p96
        %p228 = pneg %p120
        %p229 = pneg %p117
        %p230 = pneg %p148
        %p231 = pneg %p145
        %s232 = sand.u32 %s135, 1
        %s233 = scalar_lea.sflag [#allocation4], %s232
        %s234 = sand.u32 %s135, 1
        %s235 = smul.addr %s234, 16
        %s236 = scalar_lea.vmem [#allocation5], %s235
        %p237 = scmp.lt.s32.totalorder %s23, 1
        %s238 = scalar_select %p237, %s23, 1
        %s239 = smul.addr %s238, 2
        %s240 = smul.addr %s239, 8
        %s241 = scalar_lea.vmem %s0, %s240
        %p242 = scmp.lt.s32.totalorder %s24, 3
        %s243 = scalar_select %p242, %s24, 3
        %s244 = smul.addr %s243, 2
        %s245 = smul.addr %s244, 8
        %s246 = scalar_lea.vmem %s1, %s245
        %v247 = vld [vmem:[%s246] sm:$0xff]
        %v248 = vld [vmem:[%s246 + $0x8] sm:$0x3]
        %v249 = vld [vmem:[%s241] sm:$0xff]
        %v250 = vld [vmem:[%s241 + $0x8] sm:$0xff]
        %vm251 = vcmask 130048
        %v253 = vsel %vm251, %v247, 0
        %v256 = vsel %vm251, %v248, 0
        %258 = vmatpush.msra.mxu0 0.0
        %259 = vmatpush.msra.mxu0 0.0
        %260 = vmatpush.msra.mxu0 0.0
        %261 = vmatpush.msra.mxu0 0.0
        %262 = vmatpush.msra.mxu0 0.0
        %263 = vmatpush.msra.mxu0 0.0
        %264 = vmatpush.msra.mxu0 0.0
        %265 = vmatpush.msra.mxu0 0.0
        %266 = vmatpush.msra.mxu0 0.0
        %267 = vmatpush.msra.mxu0 0.0
        %268 = vmatpush.msra.mxu0 0.0
        %269 = vmatpush.msra.mxu0 0.0
        %270 = vmatpush.msra.mxu0 0.0
        %271 = vmatpush.msra.mxu0 0.0
        %272 = vmatpush.msra.mxu0 %v250
        %273 = vmatpush.msra.mxu0 %v249
        %274 = vmatmul.f32.gmra.mxu0 %v253
        %v275 = vpop.f32.mrf.mxu0
        %v276 = vadd.f32 0.0, %v275
        %277 = vmatmul.f32.gmra.mxu0 %v256
        %v278 = vpop.f32.mrf.mxu0
        %v279 = vadd.f32 0.0, %v278
        %280 = vdwg.mxu0
        %v281 = vld [vmem:[#allocation2] sm:$0xff]
        %v282 = vld [vmem:[#allocation2 + $0x8] sm:$0xff]
        %v283 = vld [vmem:[#allocation2 + $0x10] sm:$0xff]
        %v284 = vld [vmem:[#allocation2 + $0x18] sm:$0xff]
        %v285 = vld [vmem:[#allocation2 + $0x20] sm:$0xff]
        %v286 = vld [vmem:[#allocation2 + $0x28] sm:$0xff]
        %v287 = vld [vmem:[#allocation2 + $0x30] sm:$0xff]
        %v288 = vld [vmem:[#allocation2 + $0x38] sm:$0xff]
        %v289 = vld [vmem:[#allocation2 + $0x40] sm:$0xff]
        %v290 = vld [vmem:[#allocation2 + $0x48] sm:$0xff]
        %v291 = vld [vmem:[#allocation2 + $0x50] sm:$0xff]
        %v292 = vld [vmem:[#allocation2 + $0x58] sm:$0xff]
        %v293 = vld [vmem:[#allocation2 + $0x60] sm:$0xff]
        %v294 = vld [vmem:[#allocation2 + $0x68] sm:$0xff]
        %v295 = vld [vmem:[#allocation2 + $0x70] sm:$0xff]
        %v296 = vld [vmem:[#allocation2 + $0x78] sm:$0xff]
        %s297 = scalar_lea.vmem [#allocation2], 128
        %v298 = vld [vmem:[%s297] sm:$0xff]
        %v299 = vld [vmem:[%s297 + $0x8] sm:$0xff]
        %v300 = vld [vmem:[%s297 + $0x10] sm:$0xff]
        %v301 = vld [vmem:[%s297 + $0x18] sm:$0xff]
        %v302 = vld [vmem:[%s297 + $0x20] sm:$0xff]
        %v303 = vld [vmem:[%s297 + $0x28] sm:$0xff]
        %v304 = vld [vmem:[%s297 + $0x30] sm:$0xff]
        %v305 = vld [vmem:[%s297 + $0x38] sm:$0xff]
        %v306 = vld [vmem:[%s297 + $0x40] sm:$0xff]
        %v307 = vld [vmem:[%s297 + $0x48] sm:$0xff]
        %v308 = vld [vmem:[%s297 + $0x50] sm:$0xff]
        %v309 = vld [vmem:[%s297 + $0x58] sm:$0xff]
        %v310 = vld [vmem:[%s297 + $0x60] sm:$0xff]
        %v311 = vld [vmem:[%s297 + $0x68] sm:$0xff]
        %v312 = vld [vmem:[%s297 + $0x70] sm:$0xff]
        %v313 = vld [vmem:[%s297 + $0x78] sm:$0xff]
        %vm316 = vcmask 1046528
        %v317 = vrot.slane %v276, 1
        %v318 = vrot.slane %v279, 1
        %v319 = vsel %vm316, %v317, %v318
        %vm320 = vcmask 523264
        %v321 = vsel %vm320, %v319, 0
        %323 = vmatpush.msra.mxu0 0.0
        %324 = vmatpush.msra.mxu0 0.0
        %325 = vmatpush.msra.mxu0 0.0
        %326 = vmatpush.msra.mxu0 0.0
        %327 = vmatpush.msra.mxu0 0.0
        %328 = vmatpush.msra.mxu0 0.0
        %329 = vmatpush.msra.mxu0 0.0
        %330 = vmatpush.msra.mxu0 0.0
        %331 = vmatpush.msra.mxu0 %v312
        %332 = vmatpush.msra.mxu0 %v310
        %333 = vmatpush.msra.mxu0 %v308
        %334 = vmatpush.msra.mxu0 %v306
        %335 = vmatpush.msra.mxu0 %v304
        %336 = vmatpush.msra.mxu0 %v302
        %337 = vmatpush.msra.mxu0 %v300
        %338 = vmatpush.msra.mxu0 %v298
        %339 = vmatmul.f32.gmra.mxu0 %v321
        %v340 = vpop.f32.mrf.mxu0
        %v341 = vadd.f32 0.0, %v340
        %342 = vdwg.mxu0
        %343 = vmatpush.msra.mxu0 0.0
        %344 = vmatpush.msra.mxu0 0.0
        %345 = vmatpush.msra.mxu0 0.0
        %346 = vmatpush.msra.mxu0 0.0
        %347 = vmatpush.msra.mxu0 0.0
        %348 = vmatpush.msra.mxu0 0.0
        %349 = vmatpush.msra.mxu0 0.0
        %350 = vmatpush.msra.mxu0 0.0
        %351 = vmatpush.msra.mxu0 %v313
        %352 = vmatpush.msra.mxu0 %v311
        %353 = vmatpush.msra.mxu0 %v309
        %354 = vmatpush.msra.mxu0 %v307
        %355 = vmatpush.msra.mxu0 %v305
        %356 = vmatpush.msra.mxu0 %v303
        %357 = vmatpush.msra.mxu0 %v301
        %358 = vmatpush.msra.mxu0 %v299
        %359 = vmatmul.f32.gmra.mxu0 %v321
        %v360 = vpop.f32.mrf.mxu0
        %v361 = vadd.f32 0.0, %v360
        %362 = vdwg.mxu0
        %v363 = vsel %vm320, %v276, 0
        %365 = vmatpush.msra.mxu0 0.0
        %366 = vmatpush.msra.mxu0 0.0
        %367 = vmatpush.msra.mxu0 0.0
        %368 = vmatpush.msra.mxu0 0.0
        %369 = vmatpush.msra.mxu0 0.0
        %370 = vmatpush.msra.mxu0 0.0
        %371 = vmatpush.msra.mxu0 0.0
        %372 = vmatpush.msra.mxu0 0.0
        %373 = vmatpush.msra.mxu0 %v295
        %374 = vmatpush.msra.mxu0 %v293
        %375 = vmatpush.msra.mxu0 %v291
        %376 = vmatpush.msra.mxu0 %v289
        %377 = vmatpush.msra.mxu0 %v287
        %378 = vmatpush.msra.mxu0 %v285
        %379 = vmatpush.msra.mxu0 %v283
        %380 = vmatpush.msra.mxu0 %v281
        %381 = vmatmul.f32.gmra.mxu0 %v363
        %v382 = vpop.f32.mrf.mxu0
        %v383 = vadd.f32 %v341, %v382
        %384 = vdwg.mxu0
        %385 = vmatpush.msra.mxu0 0.0
        %386 = vmatpush.msra.mxu0 0.0
        %387 = vmatpush.msra.mxu0 0.0
        %388 = vmatpush.msra.mxu0 0.0
        %389 = vmatpush.msra.mxu0 0.0
        %390 = vmatpush.msra.mxu0 0.0
        %391 = vmatpush.msra.mxu0 0.0
        %392 = vmatpush.msra.mxu0 0.0
        %393 = vmatpush.msra.mxu0 %v296
        %394 = vmatpush.msra.mxu0 %v294
        %395 = vmatpush.msra.mxu0 %v292
        %396 = vmatpush.msra.mxu0 %v290
        %397 = vmatpush.msra.mxu0 %v288
        %398 = vmatpush.msra.mxu0 %v286
        %399 = vmatpush.msra.mxu0 %v284
        %400 = vmatpush.msra.mxu0 %v282
        %401 = vmatmul.f32.gmra.mxu0 %v363
        %v402 = vpop.f32.mrf.mxu0
        %v403 = vadd.f32 %v361, %v402
        %404 = vdwg.mxu0
        %s405 = scalar_lea.vmem [#allocation2], 256
        %v406 = vld [vmem:[%s405] sm:$0xff]
        %v407 = vld [vmem:[%s405 + $0x8] sm:$0xff]
        %v408 = vld [vmem:[%s405 + $0x10] sm:$0xff]
        %v409 = vld [vmem:[%s405 + $0x18] sm:$0xff]
        %v410 = vld [vmem:[%s405 + $0x20] sm:$0xff]
        %v411 = vld [vmem:[%s405 + $0x28] sm:$0xff]
        %v412 = vld [vmem:[%s405 + $0x30] sm:$0xff]
        %v413 = vld [vmem:[%s405 + $0x38] sm:$0xff]
        %v414 = vld [vmem:[%s405 + $0x40] sm:$0xff]
        %v415 = vld [vmem:[%s405 + $0x48] sm:$0xff]
        %v416 = vld [vmem:[%s405 + $0x50] sm:$0xff]
        %v417 = vld [vmem:[%s405 + $0x58] sm:$0xff]
        %v418 = vld [vmem:[%s405 + $0x60] sm:$0xff]
        %v419 = vld [vmem:[%s405 + $0x68] sm:$0xff]
        %v420 = vld [vmem:[%s405 + $0x70] sm:$0xff]
        %v421 = vld [vmem:[%s405 + $0x78] sm:$0xff]
        %vm422 = vcmask 1045504
        %v423 = vrot.slane %v276, 2
        %v424 = vrot.slane %v279, 2
        %v425 = vsel %vm422, %v423, %v424
        %v426 = vsel %vm320, %v425, 0
        %428 = vmatpush.msra.mxu0 0.0
        %429 = vmatpush.msra.mxu0 0.0
        %430 = vmatpush.msra.mxu0 0.0
        %431 = vmatpush.msra.mxu0 0.0
        %432 = vmatpush.msra.mxu0 0.0
        %433 = vmatpush.msra.mxu0 0.0
        %434 = vmatpush.msra.mxu0 0.0
        %435 = vmatpush.msra.mxu0 0.0
        %436 = vmatpush.msra.mxu0 %v420
        %437 = vmatpush.msra.mxu0 %v418
        %438 = vmatpush.msra.mxu0 %v416
        %439 = vmatpush.msra.mxu0 %v414
        %440 = vmatpush.msra.mxu0 %v412
        %441 = vmatpush.msra.mxu0 %v410
        %442 = vmatpush.msra.mxu0 %v408
        %443 = vmatpush.msra.mxu0 %v406
        %444 = vmatmul.f32.gmra.mxu0 %v426
        %v445 = vpop.f32.mrf.mxu0
        %v446 = vadd.f32 0.0, %v445
        %447 = vdwg.mxu0
        %448 = vmatpush.msra.mxu0 0.0
        %449 = vmatpush.msra.mxu0 0.0
        %450 = vmatpush.msra.mxu0 0.0
        %451 = vmatpush.msra.mxu0 0.0
        %452 = vmatpush.msra.mxu0 0.0
        %453 = vmatpush.msra.mxu0 0.0
        %454 = vmatpush.msra.mxu0 0.0
        %455 = vmatpush.msra.mxu0 0.0
        %456 = vmatpush.msra.mxu0 %v421
        %457 = vmatpush.msra.mxu0 %v419
        %458 = vmatpush.msra.mxu0 %v417
        %459 = vmatpush.msra.mxu0 %v415
        %460 = vmatpush.msra.mxu0 %v413
        %461 = vmatpush.msra.mxu0 %v411
        %462 = vmatpush.msra.mxu0 %v409
        %463 = vmatpush.msra.mxu0 %v407
        %464 = vmatmul.f32.gmra.mxu0 %v426
        %v465 = vpop.f32.mrf.mxu0
        %v466 = vadd.f32 0.0, %v465
        %467 = vdwg.mxu0
        %v468 = vadd.f32 %v383, %v446
        %v469 = vadd.f32 %v403, %v466
        %v470 = vld [vmem:[%s3] sm:$0x3]
        %v472 = vperm.slane %v470, 0
        %v473 = vperm.slane %v470, 1
        %v476 = vadd.f32 %v468, %v472
        %v477 = vadd.f32 %v469, %v473
        %478 = vst [vmem:[%s236] sm:$0xff] %v476
        %479 = vst [vmem:[%s236 + $0x8] sm:$0xff] %v477
        %s480 = sand.u32 %s135, 1
        %s481 = scalar_lea.sflag [#allocation4], %s480
        %s482 = sand.u32 %s135, 1
        %s483 = smul.addr %s482, 16
        %s484 = scalar_lea.vmem [#allocation5], %s483
        // Predicated region
        $region41: #{tpu_custom_call.1} parent=35 // pred_check
          %p485 = pneg %p145
        $region42: #{tpu_custom_call.1} parent=35 // pred_check_branch
          %487 = sbr.rel (%p485) target = $region44
        $region43: #{tpu_custom_call.1} parent=35 // pred_region
          %489 = vsyncadd %s481, 0
          %s490 = smul.addr %s24, 2
          %s491 = smul.addr %s23, 8
          %s492 = sadd.s32 %s490, %s491
          %s493 = smul.addr %s492, 8
          %s494 = scalar_lea.hbm %s4, %s493
          %s496 = sshll.u32 %s484, 4
          %s497 = int_to_ptr.vmem [resolvable:$true] %s496
          %s498 = sshll.u32 %s494, 4
          %s499 = int_to_ptr.hbm [resolvable:$true] %s498
          %501 = dma.vmem_to_hbm [thread:$0]  %s497, 256, %s499, %s481
        $region44: #{tpu_custom_call.1} parent=35 // pred_fallthru
          _
      $region36: #{tpu_custom_call.1} parent=5 // pred_fallthru
        _
      %p502 = scmp.le.s32.totalorder 2, %s14
      // Predicated region
      $region45: #{tpu_custom_call.1} parent=5 // pred_check
        %p503 = pneg %p502
      $region46: #{tpu_custom_call.1} parent=5 // pred_check_branch
        %505 = sbr.rel (%p503) target = $region48
      $region47: #{tpu_custom_call.1} parent=5 // pred_region
        %s506 = ssub.s32 %s14, 2
        // Predicated region
        $region49: #{tpu_custom_call.1} parent=47 // pred_check
          %p507 = pneg %p151
        $region50: #{tpu_custom_call.1} parent=47 // pred_check_branch
          %509 = sbr.rel (%p507) target = $region52
        $region51: #{tpu_custom_call.1} parent=47 // pred_region
          %s510 = sand.u32 %s136, 1
          %s511 = scalar_lea.sflag [#allocation4], %s510
          %s512 = sand.u32 %s136, 1
          %s513 = smul.addr %s512, 16
          %s514 = scalar_lea.vmem [#allocation5], %s513
          %516 = dma.done %s511, 256
        $region52: #{tpu_custom_call.1} parent=47 // pred_fallthru
          _
      $region48: #{tpu_custom_call.1} parent=5 // pred_fallthru
        _
    $region6: #{tpu_custom_call.1} parent=1 // loop_footer
      %s18 = sadd.s32 1, %s14
    $region7: #{tpu_custom_call.1} parent=1 // loop_footer_branch
      %13 = sbr.rel target = $region3
    $region8: #{tpu_custom_call.1} parent=1 // loop_exit
      _
    %517 = vsyncpa [#allocation3], 1
    %s518 = scalar_lea.sflag [#allocation3], 1
    %519 = vsyncpa %s518, 1
    %520 = vsyncpa [#allocation4], 1
    %s521 = scalar_lea.sflag [#allocation4], 1
    %522 = vsyncpa %s521, 1

</llo_original>
